<compile_context>
chip_gen: v5e
topology: v5e:2x2
jax: 0.10.0
libtpu: 0.0.40
codegen_flags: <defaults>
</compile_context>

<pallas_src>
import functools

import jax
import jax.numpy as jnp
from jax import lax
from jax.experimental import pallas as pl
from jax.experimental.pallas import tpu as pltpu


# ----------------------------------------------------------------------------
# Kernels
# ----------------------------------------------------------------------------


def _accumulate_samples(yv1, noise_ref):
    """sum_s relu(yv1 + noise[s]) without materializing an (S, TB, H) block."""
    S = noise_ref.shape[0]

    def body(s, acc):
        # (1, H) row load from VMEM, broadcast-added to the (TB, H) tile.
        return acc + jnp.maximum(yv1 + noise_ref[pl.ds(s, 1), :], 0.0)

    unroll = True if S <= 32 else 8
    return lax.fori_loop(0, S, body, jnp.zeros_like(yv1), unroll=unroll)


def _expectation_kernel_fused(
    x_ref,      # (TB, D)  batch tile of input states (matmul dtype)      VMEM
    w1_ref,     # (D, H)   dynamics layer-1 weight (matmul dtype)         VMEM
    b1_ref,     # (1, H)   dynamics layer-1 bias (f32)                    VMEM
    wf_ref,     # (H, H)   fused  w2 @ v1  (matmul dtype)                 VMEM
    noise_ref,  # (S, H)   (loc + scale*eps_s + b2) @ v1 + c1  (f32)      VMEM
    v2s_ref,    # (1, H)   v2 (optionally /S), row layout (f32)           VMEM
    c2_ref,     # (1,)     barrier output bias scalar                     SMEM
    out_ref,    # (TB, 1)  result for this batch tile (f32)               VMEM
    *,
    matmul_dtype,
):
    # dynamics layer 1 (f32 accumulation)
    h = jnp.maximum(
        jnp.dot(x_ref[...].astype(matmul_dtype), w1_ref[...],
                preferred_element_type=jnp.float32) + b1_ref[...],
        0.0,
    )
    # fused dynamics layer 2 + barrier layer 1 (deterministic part)
    yv1 = jnp.dot(h.astype(matmul_dtype), wf_ref[...],
                  preferred_element_type=jnp.float32)          # (TB, H) f32

    acc = _accumulate_samples(yv1, noise_ref)                  # (TB, H) f32

    # final linear layer: VPU multiply + lane reduction (+ scalar bias)
    out_ref[...] = (
        jnp.sum(acc * v2s_ref[...], axis=1, keepdims=True) + c2_ref[0]
    )


def _expectation_kernel_unfused(
    x_ref,      # (TB, D)
    w1_ref,     # (D, H)
    b1_ref,     # (1, H)
    w2_ref,     # (H, D)
    b2_ref,     # (1, D)
    v1_ref,     # (D, H)
    noise_ref,  # (S, H)   (loc + scale*eps_s) @ v1 + c1
    v2s_ref,    # (1, H)
    c2_ref,     # (1,)     SMEM
    out_ref,    # (TB, 1)
    *,
    matmul_dtype,
):
    h = jnp.maximum(
        jnp.dot(x_ref[...].astype(matmul_dtype), w1_ref[...],
                preferred_element_type=jnp.float32) + b1_ref[...],
        0.0,
    )
    y = jnp.dot(h.astype(matmul_dtype), w2_ref[...],
                preferred_element_type=jnp.float32) + b2_ref[...]
    yv1 = jnp.dot(y.astype(matmul_dtype), v1_ref[...],
                  preferred_element_type=jnp.float32)

    acc = _accumulate_samples(yv1, noise_ref)

    out_ref[...] = (
        jnp.sum(acc * v2s_ref[...], axis=1, keepdims=True) + c2_ref[0]
    )


# ----------------------------------------------------------------------------
# Wrapper
# ----------------------------------------------------------------------------

_TILE_VMEM_BUDGET = 24 << 20   # conservative: fits all generations incl. v7x


def _default_matmul_dtype():
    """bf16 matmul inputs on v6e/v7x (MXU full rate); f32 on v5e and older."""
    try:
        kind = jax.devices()[0].device_kind.lower()
    except Exception:
        return jnp.float32
    for old in ("v2", "v3", "v4", "v5"):
        if old in kind:
            return jnp.float32
    return jnp.bfloat16


def _footprint_bytes(tb, d, h, s, mm_itemsize):
    """Rough per-grid-step VMEM footprint (buffers + weights + working set)."""
    buf = 2 * tb * d * mm_itemsize          # double-buffered x tile
    buf += 2 * tb * 1 * 4                   # double-buffered output tile
    buf += 2 * (d * h + h * h) * mm_itemsize  # weights (fused upper bound)
    buf += (h + s * h + h + 8) * 4          # b1, noise, v2/S, c2
    buf += 3 * tb * h * 4                   # h / yv1 / acc working tiles
    return buf


def _pick_batch_tile(b, d, h, s, mm_itemsize):
    cands = [t for t in (1024, 512, 256, 128, 64, 32, 16, 8)
             if t <= b and b % t == 0
             and _footprint_bytes(t, d, h, s, mm_itemsize) <= _TILE_VMEM_BUDGET]
    if not cands:
        return b                            # tiny/odd batch: one full tile
    # Prefer a >= 2-step grid (keeps v7x's second TensorCore busy).
    multi = [t for t in cands if b // t >= 2]
    return (multi or cands)[0]


def additive_gaussian_expectation(x, eps, params, loc, scale, *,
                                  average=True, batch_tile=None,
                                  matmul_dtype=None):
    """x: (B, D) f32, eps: (S, D) f32, loc/scale: (1, D) f32 -> (B, 1) f32."""
    B, D = x.shape
    S = eps.shape[0]
    H = params["w1"].shape[1]

    if matmul_dtype is None:
        matmul_dtype = _default_matmul_dtype()
    mm_itemsize = jnp.dtype(matmul_dtype).itemsize

    if batch_tile is None:
        batch_tile = _pick_batch_tile(B, D, H, S, mm_itemsize)
    TB = batch_tile
    assert B % TB == 0, (B, TB)
    grid = (B // TB,)

    # ---- grid-invariant precomputation (plain XLA, done once) --------------
    # Fold 1/S (expectation) into the last linear layer.  c2 is unaffected by
    # averaging (it is summed S times then divided by S); for a literal sum
    # it is scaled by S instead.
    samp_scale = (1.0 / S) if average else 1.0
    v2s = (params["v2"].reshape(1, H) * samp_scale).astype(jnp.float32)
    c2 = (params["c2"].reshape(-1) * (1.0 if average else float(S))).astype(
        jnp.float32)

    fused = H <= 2 * D   # fusion only saves FLOPs in this regime
    if fused:
        # barrier-layer-1 noise term, with b2 @ v1 folded in (kernel never
        # forms y): noise_s = (loc + scale*eps_s + b2) @ v1 + c1
        noise = (loc + scale * eps + params["b2"]) @ params["v1"] + params["c1"]
        w_fused = (params["w2"] @ params["v1"]).astype(matmul_dtype)   # (H, H)
        kernel = functools.partial(_expectation_kernel_fused,
                                   matmul_dtype=matmul_dtype)
        weight_args = (params["w1"].astype(matmul_dtype),
                       params["b1"].astype(jnp.float32),
                       w_fused)
        weight_shapes = [(D, H), (1, H), (H, H)]
    else:
        noise = (loc + scale * eps) @ params["v1"] + params["c1"]
        kernel = functools.partial(_expectation_kernel_unfused,
                                   matmul_dtype=matmul_dtype)
        weight_args = (params["w1"].astype(matmul_dtype),
                       params["b1"].astype(jnp.float32),
                       params["w2"].astype(matmul_dtype),
                       params["b2"].astype(jnp.float32),
                       params["v1"].astype(matmul_dtype))
        weight_shapes = [(D, H), (1, H), (H, D), (1, D), (D, H)]
    noise = noise.astype(jnp.float32)                                   # (S, H)
    x_in = x.astype(matmul_dtype)   # halves streamed-x DMA when bf16

    # Replicated (grid-invariant) full-array blocks.
    def rep(shape):
        return pl.BlockSpec(shape, lambda i: (0,) * len(shape))

    vmem_limit = min(48 << 20,
                     max(16 << 20,
                         4 * _footprint_bytes(TB, D, H, S, mm_itemsize)))

    return pl.pallas_call(
        kernel,
        out_shape=jax.ShapeDtypeStruct((B, 1), jnp.float32),
        grid_spec=pltpu.PrefetchScalarGridSpec(
            num_scalar_prefetch=0,
            grid=grid,
            in_specs=[
                pl.BlockSpec((TB, D), lambda i: (i, 0)),   # x batch tile
                *[rep(s) for s in weight_shapes],          # weights / biases
                rep((S, H)),                               # precomputed noise
                rep((1, H)),                               # v2 (1/S folded)
                pl.BlockSpec(memory_space=pltpu.MemorySpace.SMEM),   # c2 scalar
            ],
            out_specs=pl.BlockSpec((TB, 1), lambda i: (i, 0)),
        ),
        compiler_params=pltpu.CompilerParams(
            dimension_semantics=("parallel",),   # batch tiles are independent
            vmem_limit_bytes=vmem_limit,
        ),
    )(x_in, *weight_args, noise, v2s, c2)


# ----------------------------------------------------------------------------
# Pure-JAX reference (natural, unfused, f32 formulation)
# ----------------------------------------------------------------------------


def _reference(x, eps, params, loc, scale):
    h = jnp.maximum(x @ params["w1"] + params["b1"], 0.0)
    y = h @ params["w2"] + params["b2"]                                  # (B, D)
    z = y[None, :, :] + loc[None, :, :] + scale[None, :, :] * eps[:, None, :]
    hb = jnp.maximum(z @ params["v1"] + params["c1"], 0.0)
    b = hb @ params["v2"] + params["c2"]                                 # (S, B, 1)
    return (b / eps.shape[0]).sum(axis=0)                                # (B, 1)


if __name__ == "__main__":
    key = jax.random.PRNGKey(0)
    ks = jax.random.split(key, 12)

    B, D, H, S = 16, 16, 32, 16   # batch, state dim, hidden dim, noise samples

    params = {
        "w1": jax.random.normal(ks[0], (D, H), jnp.float32) * 0.1,
        "b1": jax.random.normal(ks[1], (1, H), jnp.float32) * 0.1,
        "w2": jax.random.normal(ks[2], (H, D), jnp.float32) * 0.1,
        "b2": jax.random.normal(ks[3], (1, D), jnp.float32) * 0.1,
        "v1": jax.random.normal(ks[4], (D, H), jnp.float32) * 0.1,
        "c1": jax.random.normal(ks[5], (1, H), jnp.float32) * 0.1,
        "v2": jax.random.normal(ks[6], (H, 1), jnp.float32) * 0.1,
        "c2": jax.random.normal(ks[7], (1, 1), jnp.float32) * 0.1,
    }
    loc = jnp.full((1, D), 0.05, jnp.float32)
    scale = jnp.full((1, D), 0.2, jnp.float32)

    x = jax.random.normal(ks[8], (B, D), jnp.float32)
    eps = jax.random.normal(ks[9], (S, D), jnp.float32)  # deterministic draws

    mm_dtype = _default_matmul_dtype()
    out = additive_gaussian_expectation(x, eps, params, loc, scale,
                                        matmul_dtype=mm_dtype)
    out = jax.block_until_ready(out)

    ref = _reference(x, eps, params, loc, scale)
    assert out.shape == (B, 1)

    # Tolerance accounts for bf16 MXU inputs on v6e/v7x and for reduced-
    # precision / reassociated matmuls; a genuine algebra bug errs at the
    # output scale (~1e-1), far above these bounds.
    if jnp.dtype(mm_dtype) == jnp.dtype(jnp.bfloat16):
        atol, rtol = 2e-2, 5e-2
    else:
        atol, rtol = 5e-3, 1e-2
    assert jnp.allclose(out, ref, atol=atol, rtol=rtol), (out, ref)

    print("KERNEL_OK")
</pallas_src>

<mosaic_0001>
module attributes {stable_mosaic.version = 11 : i64} {
  func.func @_expectation_kernel_fused(%arg0: i32, %arg1: memref<8x16xbf16, #tpu.memory_space<vmem>>, %arg2: memref<16x32xbf16, #tpu.memory_space<vmem>>, %arg3: memref<1x32xf32, #tpu.memory_space<vmem>>, %arg4: memref<32x32xbf16, #tpu.memory_space<vmem>>, %arg5: memref<16x32xf32, #tpu.memory_space<vmem>>, %arg6: memref<1x32xf32, #tpu.memory_space<vmem>>, %arg7: memref<1xf32, #tpu.memory_space<smem>>, %arg8: memref<8x1xf32, #tpu.memory_space<vmem>>) attributes {dimension_semantics = [#tpu.dimension_semantics<parallel>], iteration_bounds = array<i64: 2>, scalar_prefetch = 0 : i64, scratch_operands = 0 : i64, tpu.core_type = #tpu.core_type<tc>, window_params = [{transform_indices = @transform_0, window_bounds = array<i64: 8, 16>}, {pipeline_mode = #tpu.pipeline_mode<synchronous>, transform_indices = @transform_1, window_bounds = array<i64: 16, 32>}, {pipeline_mode = #tpu.pipeline_mode<synchronous>, transform_indices = @transform_2, window_bounds = array<i64: 1, 32>}, {pipeline_mode = #tpu.pipeline_mode<synchronous>, transform_indices = @transform_3, window_bounds = array<i64: 32, 32>}, {pipeline_mode = #tpu.pipeline_mode<synchronous>, transform_indices = @transform_4, window_bounds = array<i64: 16, 32>}, {pipeline_mode = #tpu.pipeline_mode<synchronous>, transform_indices = @transform_5, window_bounds = array<i64: 1, 32>}, {transform_indices = @transform_6, window_bounds = array<i64: 1>}, {transform_indices = @transform_7, window_bounds = array<i64: 8, 1>}]} {
    %c0 = arith.constant 0 : index
    %c0_0 = arith.constant 0 : index
    %0 = vector.load %arg1[%c0, %c0_0] : memref<8x16xbf16, #tpu.memory_space<vmem>>, vector<8x16xbf16>
    %c0_1 = arith.constant 0 : index
    %c0_2 = arith.constant 0 : index
    %1 = vector.load %arg2[%c0_1, %c0_2] : memref<16x32xbf16, #tpu.memory_space<vmem>>, vector<16x32xbf16>
    %cst = arith.constant dense<0.000000e+00> : vector<8x32xf32>
    %2 = tpu.matmul %0, %1, %cst {dimension_numbers = #tpu.dot_dimension_numbers<[1], [0], [0], [1], [0, 0, 1, 1], [], []>} : vector<8x16xbf16>, vector<16x32xbf16>, vector<8x32xf32> -> vector<8x32xf32>
    %c0_3 = arith.constant 0 : index
    %c0_4 = arith.constant 0 : index
    %3 = vector.load %arg3[%c0_3, %c0_4] : memref<1x32xf32, #tpu.memory_space<vmem>>, vector<1x32xf32>
    %4 = vector.broadcast %3 : vector<1x32xf32> to vector<8x32xf32>
    %5 = arith.addf %2, %4 : vector<8x32xf32>
    %cst_5 = arith.constant 0.000000e+00 : f32
    %6 = vector.broadcast %cst_5 : f32 to vector<8x32xf32>
    %7 = arith.maximumf %5, %6 : vector<8x32xf32>
    %8 = arith.truncf %7 : vector<8x32xf32> to vector<8x32xbf16>
    %c0_6 = arith.constant 0 : index
    %c0_7 = arith.constant 0 : index
    %9 = vector.load %arg4[%c0_6, %c0_7] : memref<32x32xbf16, #tpu.memory_space<vmem>>, vector<32x32xbf16>
    %cst_8 = arith.constant dense<0.000000e+00> : vector<8x32xf32>
    %10 = tpu.matmul %8, %9, %cst_8 {dimension_numbers = #tpu.dot_dimension_numbers<[1], [0], [0], [1], [0, 0, 1, 1], [], []>} : vector<8x32xbf16>, vector<32x32xbf16>, vector<8x32xf32> -> vector<8x32xf32>
    %cst_9 = arith.constant 0.000000e+00 : f32
    %11 = vector.broadcast %cst_9 : f32 to vector<8x32xf32>
    %c0_i32 = arith.constant 0 : i32
    %12 = arith.index_cast %c0_i32 : i32 to index
    %c0_10 = arith.constant 0 : index
    %13 = vector.load %arg5[%12, %c0_10] : memref<16x32xf32, #tpu.memory_space<vmem>>, vector<1x32xf32>
    %14 = vector.broadcast %13 : vector<1x32xf32> to vector<8x32xf32>
    %15 = arith.addf %10, %14 : vector<8x32xf32>
    %cst_11 = arith.constant 0.000000e+00 : f32
    %16 = vector.broadcast %cst_11 : f32 to vector<8x32xf32>
    %17 = arith.maximumf %15, %16 : vector<8x32xf32>
    %18 = arith.addf %11, %17 : vector<8x32xf32>
    %c1_i32 = arith.constant 1 : i32
    %19 = arith.index_cast %c1_i32 : i32 to index
    %c0_12 = arith.constant 0 : index
    %20 = vector.load %arg5[%19, %c0_12] : memref<16x32xf32, #tpu.memory_space<vmem>>, vector<1x32xf32>
    %21 = vector.broadcast %20 : vector<1x32xf32> to vector<8x32xf32>
    %22 = arith.addf %10, %21 : vector<8x32xf32>
    %cst_13 = arith.constant 0.000000e+00 : f32
    %23 = vector.broadcast %cst_13 : f32 to vector<8x32xf32>
    %24 = arith.maximumf %22, %23 : vector<8x32xf32>
    %25 = arith.addf %18, %24 : vector<8x32xf32>
    %c2_i32 = arith.constant 2 : i32
    %26 = arith.index_cast %c2_i32 : i32 to index
    %c0_14 = arith.constant 0 : index
    %27 = vector.load %arg5[%26, %c0_14] : memref<16x32xf32, #tpu.memory_space<vmem>>, vector<1x32xf32>
    %28 = vector.broadcast %27 : vector<1x32xf32> to vector<8x32xf32>
    %29 = arith.addf %10, %28 : vector<8x32xf32>
    %cst_15 = arith.constant 0.000000e+00 : f32
    %30 = vector.broadcast %cst_15 : f32 to vector<8x32xf32>
    %31 = arith.maximumf %29, %30 : vector<8x32xf32>
    %32 = arith.addf %25, %31 : vector<8x32xf32>
    %c3_i32 = arith.constant 3 : i32
    %33 = arith.index_cast %c3_i32 : i32 to index
    %c0_16 = arith.constant 0 : index
    %34 = vector.load %arg5[%33, %c0_16] : memref<16x32xf32, #tpu.memory_space<vmem>>, vector<1x32xf32>
    %35 = vector.broadcast %34 : vector<1x32xf32> to vector<8x32xf32>
    %36 = arith.addf %10, %35 : vector<8x32xf32>
    %cst_17 = arith.constant 0.000000e+00 : f32
    %37 = vector.broadcast %cst_17 : f32 to vector<8x32xf32>
    %38 = arith.maximumf %36, %37 : vector<8x32xf32>
    %39 = arith.addf %32, %38 : vector<8x32xf32>
    %c4_i32 = arith.constant 4 : i32
    %40 = arith.index_cast %c4_i32 : i32 to index
    %c0_18 = arith.constant 0 : index
    %41 = vector.load %arg5[%40, %c0_18] : memref<16x32xf32, #tpu.memory_space<vmem>>, vector<1x32xf32>
    %42 = vector.broadcast %41 : vector<1x32xf32> to vector<8x32xf32>
    %43 = arith.addf %10, %42 : vector<8x32xf32>
    %cst_19 = arith.constant 0.000000e+00 : f32
    %44 = vector.broadcast %cst_19 : f32 to vector<8x32xf32>
    %45 = arith.maximumf %43, %44 : vector<8x32xf32>
    %46 = arith.addf %39, %45 : vector<8x32xf32>
    %c5_i32 = arith.constant 5 : i32
    %47 = arith.index_cast %c5_i32 : i32 to index
    %c0_20 = arith.constant 0 : index
    %48 = vector.load %arg5[%47, %c0_20] : memref<16x32xf32, #tpu.memory_space<vmem>>, vector<1x32xf32>
    %49 = vector.broadcast %48 : vector<1x32xf32> to vector<8x32xf32>
    %50 = arith.addf %10, %49 : vector<8x32xf32>
    %cst_21 = arith.constant 0.000000e+00 : f32
    %51 = vector.broadcast %cst_21 : f32 to vector<8x32xf32>
    %52 = arith.maximumf %50, %51 : vector<8x32xf32>
    %53 = arith.addf %46, %52 : vector<8x32xf32>
    %c6_i32 = arith.constant 6 : i32
    %54 = arith.index_cast %c6_i32 : i32 to index
    %c0_22 = arith.constant 0 : index
    %55 = vector.load %arg5[%54, %c0_22] : memref<16x32xf32, #tpu.memory_space<vmem>>, vector<1x32xf32>
    %56 = vector.broadcast %55 : vector<1x32xf32> to vector<8x32xf32>
    %57 = arith.addf %10, %56 : vector<8x32xf32>
    %cst_23 = arith.constant 0.000000e+00 : f32
    %58 = vector.broadcast %cst_23 : f32 to vector<8x32xf32>
    %59 = arith.maximumf %57, %58 : vector<8x32xf32>
    %60 = arith.addf %53, %59 : vector<8x32xf32>
    %c7_i32 = arith.constant 7 : i32
    %61 = arith.index_cast %c7_i32 : i32 to index
    %c0_24 = arith.constant 0 : index
    %62 = vector.load %arg5[%61, %c0_24] : memref<16x32xf32, #tpu.memory_space<vmem>>, vector<1x32xf32>
    %63 = vector.broadcast %62 : vector<1x32xf32> to vector<8x32xf32>
    %64 = arith.addf %10, %63 : vector<8x32xf32>
    %cst_25 = arith.constant 0.000000e+00 : f32
    %65 = vector.broadcast %cst_25 : f32 to vector<8x32xf32>
    %66 = arith.maximumf %64, %65 : vector<8x32xf32>
    %67 = arith.addf %60, %66 : vector<8x32xf32>
    %c8_i32 = arith.constant 8 : i32
    %68 = arith.index_cast %c8_i32 : i32 to index
    %c0_26 = arith.constant 0 : index
    %69 = vector.load %arg5[%68, %c0_26] : memref<16x32xf32, #tpu.memory_space<vmem>>, vector<1x32xf32>
    %70 = vector.broadcast %69 : vector<1x32xf32> to vector<8x32xf32>
    %71 = arith.addf %10, %70 : vector<8x32xf32>
    %cst_27 = arith.constant 0.000000e+00 : f32
    %72 = vector.broadcast %cst_27 : f32 to vector<8x32xf32>
    %73 = arith.maximumf %71, %72 : vector<8x32xf32>
    %74 = arith.addf %67, %73 : vector<8x32xf32>
    %c9_i32 = arith.constant 9 : i32
    %75 = arith.index_cast %c9_i32 : i32 to index
    %c0_28 = arith.constant 0 : index
    %76 = vector.load %arg5[%75, %c0_28] : memref<16x32xf32, #tpu.memory_space<vmem>>, vector<1x32xf32>
    %77 = vector.broadcast %76 : vector<1x32xf32> to vector<8x32xf32>
    %78 = arith.addf %10, %77 : vector<8x32xf32>
    %cst_29 = arith.constant 0.000000e+00 : f32
    %79 = vector.broadcast %cst_29 : f32 to vector<8x32xf32>
    %80 = arith.maximumf %78, %79 : vector<8x32xf32>
    %81 = arith.addf %74, %80 : vector<8x32xf32>
    %c10_i32 = arith.constant 10 : i32
    %82 = arith.index_cast %c10_i32 : i32 to index
    %c0_30 = arith.constant 0 : index
    %83 = vector.load %arg5[%82, %c0_30] : memref<16x32xf32, #tpu.memory_space<vmem>>, vector<1x32xf32>
    %84 = vector.broadcast %83 : vector<1x32xf32> to vector<8x32xf32>
    %85 = arith.addf %10, %84 : vector<8x32xf32>
    %cst_31 = arith.constant 0.000000e+00 : f32
    %86 = vector.broadcast %cst_31 : f32 to vector<8x32xf32>
    %87 = arith.maximumf %85, %86 : vector<8x32xf32>
    %88 = arith.addf %81, %87 : vector<8x32xf32>
    %c11_i32 = arith.constant 11 : i32
    %89 = arith.index_cast %c11_i32 : i32 to index
    %c0_32 = arith.constant 0 : index
    %90 = vector.load %arg5[%89, %c0_32] : memref<16x32xf32, #tpu.memory_space<vmem>>, vector<1x32xf32>
    %91 = vector.broadcast %90 : vector<1x32xf32> to vector<8x32xf32>
    %92 = arith.addf %10, %91 : vector<8x32xf32>
    %cst_33 = arith.constant 0.000000e+00 : f32
    %93 = vector.broadcast %cst_33 : f32 to vector<8x32xf32>
    %94 = arith.maximumf %92, %93 : vector<8x32xf32>
    %95 = arith.addf %88, %94 : vector<8x32xf32>
    %c12_i32 = arith.constant 12 : i32
    %96 = arith.index_cast %c12_i32 : i32 to index
    %c0_34 = arith.constant 0 : index
    %97 = vector.load %arg5[%96, %c0_34] : memref<16x32xf32, #tpu.memory_space<vmem>>, vector<1x32xf32>
    %98 = vector.broadcast %97 : vector<1x32xf32> to vector<8x32xf32>
    %99 = arith.addf %10, %98 : vector<8x32xf32>
    %cst_35 = arith.constant 0.000000e+00 : f32
    %100 = vector.broadcast %cst_35 : f32 to vector<8x32xf32>
    %101 = arith.maximumf %99, %100 : vector<8x32xf32>
    %102 = arith.addf %95, %101 : vector<8x32xf32>
    %c13_i32 = arith.constant 13 : i32
    %103 = arith.index_cast %c13_i32 : i32 to index
    %c0_36 = arith.constant 0 : index
    %104 = vector.load %arg5[%103, %c0_36] : memref<16x32xf32, #tpu.memory_space<vmem>>, vector<1x32xf32>
    %105 = vector.broadcast %104 : vector<1x32xf32> to vector<8x32xf32>
    %106 = arith.addf %10, %105 : vector<8x32xf32>
    %cst_37 = arith.constant 0.000000e+00 : f32
    %107 = vector.broadcast %cst_37 : f32 to vector<8x32xf32>
    %108 = arith.maximumf %106, %107 : vector<8x32xf32>
    %109 = arith.addf %102, %108 : vector<8x32xf32>
    %c14_i32 = arith.constant 14 : i32
    %110 = arith.index_cast %c14_i32 : i32 to index
    %c0_38 = arith.constant 0 : index
    %111 = vector.load %arg5[%110, %c0_38] : memref<16x32xf32, #tpu.memory_space<vmem>>, vector<1x32xf32>
    %112 = vector.broadcast %111 : vector<1x32xf32> to vector<8x32xf32>
    %113 = arith.addf %10, %112 : vector<8x32xf32>
    %cst_39 = arith.constant 0.000000e+00 : f32
    %114 = vector.broadcast %cst_39 : f32 to vector<8x32xf32>
    %115 = arith.maximumf %113, %114 : vector<8x32xf32>
    %116 = arith.addf %109, %115 : vector<8x32xf32>
    %c15_i32 = arith.constant 15 : i32
    %117 = arith.index_cast %c15_i32 : i32 to index
    %c0_40 = arith.constant 0 : index
    %118 = vector.load %arg5[%117, %c0_40] : memref<16x32xf32, #tpu.memory_space<vmem>>, vector<1x32xf32>
    %119 = vector.broadcast %118 : vector<1x32xf32> to vector<8x32xf32>
    %120 = arith.addf %10, %119 : vector<8x32xf32>
    %cst_41 = arith.constant 0.000000e+00 : f32
    %121 = vector.broadcast %cst_41 : f32 to vector<8x32xf32>
    %122 = arith.maximumf %120, %121 : vector<8x32xf32>
    %123 = arith.addf %116, %122 : vector<8x32xf32>
    %c16_i32 = arith.constant 16 : i32
    %c0_42 = arith.constant 0 : index
    %c0_43 = arith.constant 0 : index
    %124 = vector.load %arg6[%c0_42, %c0_43] : memref<1x32xf32, #tpu.memory_space<vmem>>, vector<1x32xf32>
    %125 = vector.broadcast %124 : vector<1x32xf32> to vector<8x32xf32>
    %126 = arith.mulf %123, %125 : vector<8x32xf32>
    %cst_44 = arith.constant dense<0.000000e+00> : vector<8xf32>
    %127 = vector.multi_reduction <add>, %126, %cst_44 [1] : vector<8x32xf32> to vector<8xf32>
    %128 = vector.shape_cast %127 : vector<8xf32> to vector<8x1xf32>
    %c0_45 = arith.constant 0 : index
    %129 = memref.load %arg7[%c0_45] : memref<1xf32, #tpu.memory_space<smem>>
    %130 = vector.broadcast %129 : f32 to vector<8x1xf32>
    %131 = arith.addf %128, %130 : vector<8x1xf32>
    %c0_46 = arith.constant 0 : index
    %c0_47 = arith.constant 0 : index
    %132 = vector.load %arg8[%c0_46, %c0_47] : memref<8x1xf32, #tpu.memory_space<vmem>>, vector<8x1xf32>
    tpu.vector_store %arg8[%c0_46, %c0_47], %131 {strides = array<i32>} : memref<8x1xf32, #tpu.memory_space<vmem>>, vector<8x1xf32>,
    return
  }
  func.func @transform_0(%arg0: i32) -> (i32, i32) {
    %c0_i32 = arith.constant 0 : i32
    %c0_i32_0 = arith.constant 0 : i32
    return %arg0, %c0_i32 : i32, i32
  }
  func.func @transform_1(%arg0: i32) -> (i32, i32) {
    %c0_i32 = arith.constant 0 : i32
    %c0_i32_0 = arith.constant 0 : i32
    %c0_i32_1 = arith.constant 0 : i32
    return %c0_i32, %c0_i32_0 : i32, i32
  }
  func.func @transform_2(%arg0: i32) -> (i32, i32) {
    %c0_i32 = arith.constant 0 : i32
    %c0_i32_0 = arith.constant 0 : i32
    %c0_i32_1 = arith.constant 0 : i32
    return %c0_i32, %c0_i32_0 : i32, i32
  }
  func.func @transform_3(%arg0: i32) -> (i32, i32) {
    %c0_i32 = arith.constant 0 : i32
    %c0_i32_0 = arith.constant 0 : i32
    %c0_i32_1 = arith.constant 0 : i32
    return %c0_i32, %c0_i32_0 : i32, i32
  }
  func.func @transform_4(%arg0: i32) -> (i32, i32) {
    %c0_i32 = arith.constant 0 : i32
    %c0_i32_0 = arith.constant 0 : i32
    %c0_i32_1 = arith.constant 0 : i32
    return %c0_i32, %c0_i32_0 : i32, i32
  }
  func.func @transform_5(%arg0: i32) -> (i32, i32) {
    %c0_i32 = arith.constant 0 : i32
    %c0_i32_0 = arith.constant 0 : i32
    %c0_i32_1 = arith.constant 0 : i32
    return %c0_i32, %c0_i32_0 : i32, i32
  }
  func.func @transform_6(%arg0: i32) -> i32 {
    %c0_i32 = arith.constant 0 : i32
    %c0_i32_0 = arith.constant 0 : i32
    return %c0_i32 : i32
  }
  func.func @transform_7(%arg0: i32) -> (i32, i32) {
    %c0_i32 = arith.constant 0 : i32
    %c0_i32_0 = arith.constant 0 : i32
    return %arg0, %c0_i32 : i32, i32
  }
}

</mosaic_0001>

<llo_original>
// kernel: tpu_custom_call.1
$region0: #{tpu_custom_call.1}
  #allocation0 [shape = 'u32[]', space=smem, size = 0x4, offset = 0x4, fixed_abs, tag = 'smem constant byte address 0x4 - core index']
  #allocation1 [shape = 'u32[72,128]{1,0:T(1,128)}', space=vmem, size = 0x9000, scoped, tag = 'internal scratch']
  #allocation2 [shape = 'f32[1]{0:T(128)S(6)}', space=smem, size = 0x200, scoped, tag = 'scoped memory for tpu_custom_call.1']
  %s0 = inlined_call_operand.hbm [shape: bf16[16,16], index: 0, kind: input, shape index: {}]
  %s1 = inlined_call_operand.hbm [shape: bf16[16,32], index: 1, kind: input, shape index: {}]
  %s2 = inlined_call_operand.vmem [shape: f32[1,32], index: 2, kind: input, shape index: {}]
  %s3 = inlined_call_operand.hbm [shape: bf16[32,32], index: 3, kind: input, shape index: {}]
  %s4 = inlined_call_operand.hbm [shape: f32[16,32], index: 4, kind: input, shape index: {}]
  %s5 = inlined_call_operand.vmem [shape: f32[1,32], index: 5, kind: input, shape index: {}]
  %s6 = inlined_call_operand.<no memory space> [shape: f32[1], index: 6, kind: input, shape index: {}]
  %s7 = inlined_call_operand.vmem [shape: f32[16,1], index: 7, kind: output, shape index: {}]
  %s8 = sld [smem:[#allocation0]]
  $region77: #{tpu_custom_call.1} parent=0
    _
  %s10 = ssub.s32 1, %s8
  %s11 = scalar_select 0, %s10, %s8
  %12 = sst [smem:[#allocation2]] %s6
  $region1: #{tpu_custom_call.1} parent=0
    #allocation3 [shape = 'u8[4096]{0}', space=vmem, size = 0x1000, scoped, tag = 'input window, operand 0']
    #allocation4 [shape = 's32[2]{0}', space=sflag, size = 0x8, scoped, tag = 'scoped memory for tpu_custom_call.1']
    #allocation5 [shape = 'u8[4096]{0}', space=vmem, size = 0x1000, scoped, tag = 'input window, operand 1, single buffered']
    #allocation6 [shape = 's32[1]{0}', space=sflag, size = 0x4, scoped, tag = 'scoped memory for tpu_custom_call.1']
    #allocation7 [shape = 'u8[8192]{0}', space=vmem, size = 0x2000, scoped, tag = 'input window, operand 3, single buffered']
    #allocation8 [shape = 'u8[8192]{0}', space=vmem, size = 0x2000, scoped, tag = 'input window, operand 4, single buffered']
    #allocation9 [shape = 's32[1]{0}', space=sflag, size = 0x4, scoped, tag = 'scoped memory for tpu_custom_call.1']
    %13 = vsyncpa [#allocation4], 0
    %s14 = scalar_lea.sflag [#allocation4], 1
    %15 = vsyncpa %s14, 0
    %16 = vsyncpa [#allocation6], 0
    %17 = vsyncpa [#allocation9], 0
    loop: start=0, step=1, limit=4
    $region2: #{tpu_custom_call.1} parent=1 // loop_pre_header
      _
    $region3: #{tpu_custom_call.1} parent=1 // loop_header
      %s19 = sphi 0, %s23
      %p20 = scmp.ge.s32.totalorder %s19, 4
      %s29 = sphi 0, %s31
      %s32 = sphi 0, %s29
      %s33 = sphi 0, %s32
      %s49 = sphi 0, %s33
      %s53 = sphi 0, %s53
      %s55 = sphi 0, %s53
      %s56 = sphi 0, %s55
      %s70 = sphi 0, %s56
      %s74 = sphi 0, %s74
      %s76 = sphi 0, %s74
      %s77 = sphi 0, %s76
      %s91 = sphi 0, %s77
      %s95 = sphi 0, %s95
      %s97 = sphi 0, %s95
      %s98 = sphi 0, %s97
      %s112 = sphi 0, %s98
      %s116 = sphi 0, %s116
      %s118 = sphi 0, %s116
      %s119 = sphi 0, %s118
      %s133 = sphi 0, %s119
      %s137 = sphi 0, %s137
      %s139 = sphi 0, %s137
      %s140 = sphi 0, %s139
      %s154 = sphi 0, %s140
      %s158 = sphi 0, %s158
      %s160 = sphi 0, %s158
      %s161 = sphi 0, %s160
      %s175 = sphi 0, %s161
      %s181 = sphi 0, %s183
      %s184 = sphi 0, %s181
      %s185 = sphi 0, %s184
      %s201 = sphi 0, %s185
    $region4: #{tpu_custom_call.1} parent=1 // loop_header_branch
      %22 = sbr.rel (%p20) target = $region8
    $region5: #{tpu_custom_call.1} parent=1 // loop_body
      %s24 = ssub.s32 %s19, 1
      %s25 = ssub.s32 %s19, 2
      %s26 = sadd.s32 %s19, 1
      %s27 = ssub.s32 %s19, %s26
      %p28 = scmp.eq.s32.totalorder %s27, 0
      %s30 = sadd.s32 %s29, 1
      %s31 = scalar_select %p28, %s29, %s30
      %p34 = pneg %p28
      %p35 = scmp.eq.s32.totalorder %s19, 1
      %p36 = por %p34, %p35
      %p37 = scmp.ne.s32.totalorder %s29, %s32
      %p38 = scmp.eq.s32.totalorder %s19, 0
      %p39 = por %p37, %p38
      %p40 = scmp.ne.s32.totalorder %s29, %s32
      %p41 = scmp.eq.s32.totalorder %s24, 1
      %p42 = por %p40, %p41
      %p43 = scmp.ne.s32.totalorder %s32, %s33
      %p44 = scmp.eq.s32.totalorder %s24, 0
      %p45 = por %p43, %p44
      %p46 = scmp.ne.s32.totalorder %s32, %s33
      %p47 = scmp.eq.s32.totalorder %s25, 1
      %p48 = por %p46, %p47
      %p50 = scmp.ne.s32.totalorder %s33, %s49
      %p51 = scmp.eq.s32.totalorder %s25, 0
      %p52 = por %p50, %p51
      %s54 = sadd.s32 %s53, 1
      %p57 = scmp.eq.s32.totalorder %s19, 1
      %p58 = scmp.ne.s32.totalorder %s53, %s55
      %p59 = scmp.eq.s32.totalorder %s19, 0
      %p60 = por %p58, %p59
      %p61 = scmp.ne.s32.totalorder %s53, %s55
      %p62 = scmp.eq.s32.totalorder %s24, 1
      %p63 = por %p61, %p62
      %p64 = scmp.ne.s32.totalorder %s55, %s56
      %p65 = scmp.eq.s32.totalorder %s24, 0
      %p66 = por %p64, %p65
      %p67 = scmp.ne.s32.totalorder %s55, %s56
      %p68 = scmp.eq.s32.totalorder %s25, 1
      %p69 = por %p67, %p68
      %p71 = scmp.ne.s32.totalorder %s56, %s70
      %p72 = scmp.eq.s32.totalorder %s25, 0
      %p73 = por %p71, %p72
      %s75 = sadd.s32 %s74, 1
      %p78 = scmp.eq.s32.totalorder %s19, 1
      %p79 = scmp.ne.s32.totalorder %s74, %s76
      %p80 = scmp.eq.s32.totalorder %s19, 0
      %p81 = por %p79, %p80
      %p82 = scmp.ne.s32.totalorder %s74, %s76
      %p83 = scmp.eq.s32.totalorder %s24, 1
      %p84 = por %p82, %p83
      %p85 = scmp.ne.s32.totalorder %s76, %s77
      %p86 = scmp.eq.s32.totalorder %s24, 0
      %p87 = por %p85, %p86
      %p88 = scmp.ne.s32.totalorder %s76, %s77
      %p89 = scmp.eq.s32.totalorder %s25, 1
      %p90 = por %p88, %p89
      %p92 = scmp.ne.s32.totalorder %s77, %s91
      %p93 = scmp.eq.s32.totalorder %s25, 0
      %p94 = por %p92, %p93
      %s96 = sadd.s32 %s95, 1
      %p99 = scmp.eq.s32.totalorder %s19, 1
      %p100 = scmp.ne.s32.totalorder %s95, %s97
      %p101 = scmp.eq.s32.totalorder %s19, 0
      %p102 = por %p100, %p101
      %p103 = scmp.ne.s32.totalorder %s95, %s97
      %p104 = scmp.eq.s32.totalorder %s24, 1
      %p105 = por %p103, %p104
      %p106 = scmp.ne.s32.totalorder %s97, %s98
      %p107 = scmp.eq.s32.totalorder %s24, 0
      %p108 = por %p106, %p107
      %p109 = scmp.ne.s32.totalorder %s97, %s98
      %p110 = scmp.eq.s32.totalorder %s25, 1
      %p111 = por %p109, %p110
      %p113 = scmp.ne.s32.totalorder %s98, %s112
      %p114 = scmp.eq.s32.totalorder %s25, 0
      %p115 = por %p113, %p114
      %s117 = sadd.s32 %s116, 1
      %p120 = scmp.eq.s32.totalorder %s19, 1
      %p121 = scmp.ne.s32.totalorder %s116, %s118
      %p122 = scmp.eq.s32.totalorder %s19, 0
      %p123 = por %p121, %p122
      %p124 = scmp.ne.s32.totalorder %s116, %s118
      %p125 = scmp.eq.s32.totalorder %s24, 1
      %p126 = por %p124, %p125
      %p127 = scmp.ne.s32.totalorder %s118, %s119
      %p128 = scmp.eq.s32.totalorder %s24, 0
      %p129 = por %p127, %p128
      %p130 = scmp.ne.s32.totalorder %s118, %s119
      %p131 = scmp.eq.s32.totalorder %s25, 1
      %p132 = por %p130, %p131
      %p134 = scmp.ne.s32.totalorder %s119, %s133
      %p135 = scmp.eq.s32.totalorder %s25, 0
      %p136 = por %p134, %p135
      %s138 = sadd.s32 %s137, 1
      %p141 = scmp.eq.s32.totalorder %s19, 1
      %p142 = scmp.ne.s32.totalorder %s137, %s139
      %p143 = scmp.eq.s32.totalorder %s19, 0
      %p144 = por %p142, %p143
      %p145 = scmp.ne.s32.totalorder %s137, %s139
      %p146 = scmp.eq.s32.totalorder %s24, 1
      %p147 = por %p145, %p146
      %p148 = scmp.ne.s32.totalorder %s139, %s140
      %p149 = scmp.eq.s32.totalorder %s24, 0
      %p150 = por %p148, %p149
      %p151 = scmp.ne.s32.totalorder %s139, %s140
      %p152 = scmp.eq.s32.totalorder %s25, 1
      %p153 = por %p151, %p152
      %p155 = scmp.ne.s32.totalorder %s140, %s154
      %p156 = scmp.eq.s32.totalorder %s25, 0
      %p157 = por %p155, %p156
      %s159 = sadd.s32 %s158, 1
      %p162 = scmp.eq.s32.totalorder %s19, 1
      %p163 = scmp.ne.s32.totalorder %s158, %s160
      %p164 = scmp.eq.s32.totalorder %s19, 0
      %p165 = por %p163, %p164
      %p166 = scmp.ne.s32.totalorder %s158, %s160
      %p167 = scmp.eq.s32.totalorder %s24, 1
      %p168 = por %p166, %p167
      %p169 = scmp.ne.s32.totalorder %s160, %s161
      %p170 = scmp.eq.s32.totalorder %s24, 0
      %p171 = por %p169, %p170
      %p172 = scmp.ne.s32.totalorder %s160, %s161
      %p173 = scmp.eq.s32.totalorder %s25, 1
      %p174 = por %p172, %p173
      %p176 = scmp.ne.s32.totalorder %s161, %s175
      %p177 = scmp.eq.s32.totalorder %s25, 0
      %p178 = por %p176, %p177
      %s179 = ssub.s32 %s19, %s26
      %p180 = scmp.eq.s32.totalorder %s179, 0
      %s182 = sadd.s32 %s181, 1
      %s183 = scalar_select %p180, %s181, %s182
      %p186 = pneg %p180
      %p187 = scmp.eq.s32.totalorder %s19, 1
      %p188 = por %p186, %p187
      %p189 = scmp.ne.s32.totalorder %s181, %s184
      %p190 = scmp.eq.s32.totalorder %s19, 0
      %p191 = por %p189, %p190
      %p192 = scmp.ne.s32.totalorder %s181, %s184
      %p193 = scmp.eq.s32.totalorder %s24, 1
      %p194 = por %p192, %p193
      %p195 = scmp.ne.s32.totalorder %s184, %s185
      %p196 = scmp.eq.s32.totalorder %s24, 0
      %p197 = por %p195, %p196
      %p198 = scmp.ne.s32.totalorder %s184, %s185
      %p199 = scmp.eq.s32.totalorder %s25, 1
      %p200 = por %p198, %p199
      %p202 = scmp.ne.s32.totalorder %s185, %s201
      %p203 = scmp.eq.s32.totalorder %s25, 0
      %p204 = por %p202, %p203
      %p205 = scmp.le.s32.totalorder 1, %s19
      %p206 = scmp.lt.s32.totalorder %s19, 3
      %p207 = pnand %p205, %p206
      %p208 = pneg %p207
      // Predicated region
      $region9: #{tpu_custom_call.1} parent=5 // pred_check
        _
      $region10: #{tpu_custom_call.1} parent=5 // pred_check_branch
        %210 = sbr.rel (%p207) target = $region12
      $region11: #{tpu_custom_call.1} parent=5 // pred_region
        %s211 = ssub.s32 %s19, 1
        // Predicated region
        $region13: #{tpu_custom_call.1} parent=11 // pred_check
          %p212 = pneg %p66
        $region14: #{tpu_custom_call.1} parent=11 // pred_check_branch
          %214 = sbr.rel (%p212) target = $region16
        $region15: #{tpu_custom_call.1} parent=11 // pred_region
          %216 = vsyncadd [#allocation6], 0
          %s217 = sshll.u32 %s1, 4
          %s218 = int_to_ptr.hbm [resolvable:$true] %s217
          %s219 = sshll.u32 [#allocation5], 4
          %s220 = int_to_ptr.vmem [resolvable:$true] %s219
          %225 = dma.hbm_to_vmem [thread:$0]  %s218, 128, %s220, [#allocation6], 64, 64, 4
        $region16: #{tpu_custom_call.1} parent=11 // pred_fallthru
          _
        // Predicated region
        $region17: #{tpu_custom_call.1} parent=11 // pred_check
          %p226 = pneg %p87
        $region18: #{tpu_custom_call.1} parent=11 // pred_check_branch
          %228 = sbr.rel (%p226) target = $region20
        $region19: #{tpu_custom_call.1} parent=11 // pred_region
          _
        $region20: #{tpu_custom_call.1} parent=11 // pred_fallthru
          _
        // Predicated region
        $region21: #{tpu_custom_call.1} parent=11 // pred_check
          %p229 = pneg %p108
        $region22: #{tpu_custom_call.1} parent=11 // pred_check_branch
          %231 = sbr.rel (%p229) target = $region24
        $region23: #{tpu_custom_call.1} parent=11 // pred_region
          %233 = vsyncadd [#allocation6], 0
          %s234 = sshll.u32 %s3, 4
          %s235 = int_to_ptr.hbm [resolvable:$true] %s234
          %s236 = sshll.u32 [#allocation7], 4
          %s237 = int_to_ptr.vmem [resolvable:$true] %s236
          %242 = dma.hbm_to_vmem [thread:$0]  %s235, 256, %s237, [#allocation6], 64, 64, 4
        $region24: #{tpu_custom_call.1} parent=11 // pred_fallthru
          _
        // Predicated region
        $region25: #{tpu_custom_call.1} parent=11 // pred_check
          %p243 = pneg %p129
        $region26: #{tpu_custom_call.1} parent=11 // pred_check_branch
          %245 = sbr.rel (%p243) target = $region28
        $region27: #{tpu_custom_call.1} parent=11 // pred_region
          %247 = vsyncadd [#allocation9], 0
          %s248 = sshll.u32 %s4, 4
          %s249 = int_to_ptr.hbm [resolvable:$true] %s248
          %s250 = sshll.u32 [#allocation8], 4
          %s251 = int_to_ptr.vmem [resolvable:$true] %s250
          %256 = dma.hbm_to_vmem [thread:$0]  %s249, 256, %s251, [#allocation9], 128, 128, 8
        $region28: #{tpu_custom_call.1} parent=11 // pred_fallthru
          _
        // Predicated region
        $region29: #{tpu_custom_call.1} parent=11 // pred_check
          %p257 = pneg %p150
        $region30: #{tpu_custom_call.1} parent=11 // pred_check_branch
          %259 = sbr.rel (%p257) target = $region32
        $region31: #{tpu_custom_call.1} parent=11 // pred_region
          _
        $region32: #{tpu_custom_call.1} parent=11 // pred_fallthru
          _
        // Predicated region
        $region33: #{tpu_custom_call.1} parent=11 // pred_check
          %p260 = pneg %p171
        $region34: #{tpu_custom_call.1} parent=11 // pred_check_branch
          %262 = sbr.rel (%p260) target = $region36
        $region35: #{tpu_custom_call.1} parent=11 // pred_region
          _
        $region36: #{tpu_custom_call.1} parent=11 // pred_fallthru
          _
      $region12: #{tpu_custom_call.1} parent=5 // pred_fallthru
        _
      %p263 = scmp.lt.s32.totalorder %s19, 2
      // Predicated region
      $region37: #{tpu_custom_call.1} parent=5 // pred_check
        %p264 = pneg %p263
      $region38: #{tpu_custom_call.1} parent=5 // pred_check_branch
        %266 = sbr.rel (%p264) target = $region40
      $region39: #{tpu_custom_call.1} parent=5 // pred_region
        // Predicated region
        $region41: #{tpu_custom_call.1} parent=39 // pred_check
          %p267 = pneg %p39
        $region42: #{tpu_custom_call.1} parent=39 // pred_check_branch
          %269 = sbr.rel (%p267) target = $region44
        $region43: #{tpu_custom_call.1} parent=39 // pred_region
          %s270 = sand.u32 %s29, 1
          %s271 = scalar_lea.sflag [#allocation4], %s270
          %s272 = sand.u32 %s29, 1
          %s273 = smul.addr %s272, 4
          %s274 = scalar_lea.vmem [#allocation3], %s273
          %276 = vsyncadd %s271, 0
          %s277 = smul.addr %s19, 4
          %s278 = scalar_lea.hbm %s0, %s277
          %s280 = sshll.u32 %s278, 4
          %s281 = int_to_ptr.hbm [resolvable:$true] %s280
          %s282 = sshll.u32 %s274, 4
          %s283 = int_to_ptr.vmem [resolvable:$true] %s282
          %285 = dma.hbm_to_vmem [thread:$0]  %s281, 64, %s283, %s271
        $region44: #{tpu_custom_call.1} parent=39 // pred_fallthru
          _
      $region40: #{tpu_custom_call.1} parent=5 // pred_fallthru
        _
      %p286 = scmp.le.s32.totalorder 1, %s19
      %p287 = scmp.lt.s32.totalorder %s19, 3
      %p288 = pnand %p286, %p287
      %p289 = pneg %p288
      // Predicated region
      $region45: #{tpu_custom_call.1} parent=5 // pred_check
        _
      $region46: #{tpu_custom_call.1} parent=5 // pred_check_branch
        %291 = sbr.rel (%p288) target = $region48
      $region47: #{tpu_custom_call.1} parent=5 // pred_region
        %s292 = ssub.s32 %s19, 1
        %s293 = sand.u32 %s32, 1
        %s294 = scalar_lea.sflag [#allocation4], %s293
        %s295 = sand.u32 %s32, 1
        %s296 = smul.addr %s295, 4
        %s297 = scalar_lea.vmem [#allocation3], %s296
        // Predicated region
        $region49: #{tpu_custom_call.1} parent=47 // pred_check
          %p298 = pneg %p45
        $region50: #{tpu_custom_call.1} parent=47 // pred_check_branch
          %300 = sbr.rel (%p298) target = $region52
        $region51: #{tpu_custom_call.1} parent=47 // pred_region
          %302 = dma.done %s294, 64
        $region52: #{tpu_custom_call.1} parent=47 // pred_fallthru
          _
        // Predicated region
        $region53: #{tpu_custom_call.1} parent=47 // pred_check
          %p303 = pneg %p66
        $region54: #{tpu_custom_call.1} parent=47 // pred_check_branch
          %305 = sbr.rel (%p303) target = $region56
        $region55: #{tpu_custom_call.1} parent=47 // pred_region
          %307 = dma.done [#allocation6], 128
        $region56: #{tpu_custom_call.1} parent=47 // pred_fallthru
          _
        // Predicated region
        $region57: #{tpu_custom_call.1} parent=47 // pred_check
          %p308 = pneg %p108
        $region58: #{tpu_custom_call.1} parent=47 // pred_check_branch
          %310 = sbr.rel (%p308) target = $region60
        $region59: #{tpu_custom_call.1} parent=47 // pred_region
          %312 = dma.done [#allocation6], 256
        $region60: #{tpu_custom_call.1} parent=47 // pred_fallthru
          _
        // Predicated region
        $region61: #{tpu_custom_call.1} parent=47 // pred_check
          %p313 = pneg %p129
        $region62: #{tpu_custom_call.1} parent=47 // pred_check_branch
          %315 = sbr.rel (%p313) target = $region64
        $region63: #{tpu_custom_call.1} parent=47 // pred_region
          %317 = dma.done [#allocation9], 256
        $region64: #{tpu_custom_call.1} parent=47 // pred_fallthru
          _
        %s318 = sand.u32 %s32, 1
        %s319 = scalar_lea.sflag [#allocation4], %s318
        %s320 = sand.u32 %s32, 1
        %s321 = smul.addr %s320, 4
        %s322 = scalar_lea.vmem [#allocation3], %s321
        %p323 = pneg %p45
        %p324 = pneg %p42
        %p325 = pneg %p66
        %p326 = pneg %p63
        %p327 = pneg %p87
        %p328 = pneg %p84
        %p329 = pneg %p108
        %p330 = pneg %p105
        %p331 = pneg %p129
        %p332 = pneg %p126
        %p333 = pneg %p150
        %p334 = pneg %p147
        %p335 = pneg %p171
        %p336 = pneg %p168
        %p337 = pneg %p197
        %p338 = pneg %p194
        %p339 = scmp.lt.s32.totalorder %s24, 1
        %s340 = scalar_select %p339, %s24, 1
        %s341 = smul.addr %s340, 8
        %s342 = scalar_lea.vmem %s7, %s341
        %p343 = scmp.lt.s32.totalorder %s24, 1
        %s344 = scalar_select %p343, %s24, 1
        %s345 = smul.addr %s344, 8
        %s346 = scalar_lea.vmem %s7, %s345
        %v348 = vld [vmem:[%s297] sm:$0xf]
        %v349 = vld [vmem:[#allocation5] sm:$0xf]
        %v350 = vld [vmem:[#allocation5 + $0x4] sm:$0xf]
        %v351 = vld [vmem:[%s2] sm:$0x1]
        %v353 = vperm.slane %v351, 0
        %v357 = vunpack.c.l.b16 %v349
        %v358 = vunpack.c.l.b16 %v350
        %v359 = vpack.c.b16 %v358, %v357
        %vm361 = vcmask 130048
        %v363 = vsel %vm361, %v348, 0
        %365 = vmatpush.bf16.msra.mxu0 0
        %366 = vmatpush.bf16.msra.mxu0 0
        %367 = vmatpush.bf16.msra.mxu0 0
        %368 = vmatpush.bf16.msra.mxu0 0
        %369 = vmatpush.bf16.msra.mxu0 0
        %370 = vmatpush.bf16.msra.mxu0 0
        %371 = vmatpush.bf16.msra.mxu0 0
        %372 = vmatpush.bf16.msra.mxu0 %v359
        %373 = vmatmul.bf16.gmra.mxu0 %v363
        %v374 = vpop.f32.mrf.mxu0
        %v375 = vadd.f32 %v353, %v374
        %v376 = vpop.f32.mrf.mxu0
        %377 = vdwg.mxu0
        %v378 = vmax.f32 %v375, 0.0
        %v379 = vpack.c.bf16 %v378, %v378
        %v380 = vld [vmem:[#allocation7] sm:$0xf]
        %v381 = vld [vmem:[#allocation7 + $0x4] sm:$0xf]
        %v382 = vld [vmem:[#allocation7 + $0x8] sm:$0xf]
        %v383 = vld [vmem:[#allocation7 + $0xc] sm:$0xf]
        %v388 = vunpack.c.l.b16 %v380
        %v389 = vunpack.c.l.b16 %v381
        %v390 = vunpack.c.l.b16 %v382
        %v391 = vunpack.c.l.b16 %v383
        %v392 = vpack.c.b16 %v389, %v388
        %v393 = vpack.c.b16 %v391, %v390
        %vm396 = vcmask 261120
        %v398 = vsel %vm396, %v379, 0
        %400 = vmatpush.bf16.msra.mxu0 0
        %401 = vmatpush.bf16.msra.mxu0 0
        %402 = vmatpush.bf16.msra.mxu0 0
        %403 = vmatpush.bf16.msra.mxu0 0
        %404 = vmatpush.bf16.msra.mxu0 0
        %405 = vmatpush.bf16.msra.mxu0 0
        %406 = vmatpush.bf16.msra.mxu0 %v393
        %407 = vmatpush.bf16.msra.mxu0 %v392
        %408 = vmatmul.bf16.gmra.mxu0 %v398
        %v409 = vpop.f32.mrf.mxu0
        %v410 = vadd.f32 0.0, %v409
        %v411 = vpop.f32.mrf.mxu0
        %412 = vdwg.mxu0
        %v413 = vld [vmem:[#allocation8] sm:$0x1]
        %v414 = vperm.slane %v413, 0
        %v415 = vadd.f32 %v410, %v414
        %v416 = vmax.f32 %v415, 0.0
        %v417 = vadd.f32 %v416, 0.0
        %v418 = vld [vmem:[#allocation8 + $0x1] sm:$0x1]
        %v419 = vperm.slane %v418, 0
        %v420 = vadd.f32 %v410, %v419
        %v421 = vmax.f32 %v420, 0.0
        %v422 = vadd.f32 %v417, %v421
        %v423 = vld [vmem:[#allocation8 + $0x2] sm:$0x1]
        %v424 = vperm.slane %v423, 0
        %v425 = vadd.f32 %v410, %v424
        %v426 = vmax.f32 %v425, 0.0
        %v427 = vadd.f32 %v422, %v426
        %v428 = vld [vmem:[#allocation8 + $0x3] sm:$0x1]
        %v429 = vperm.slane %v428, 0
        %v430 = vadd.f32 %v410, %v429
        %v431 = vmax.f32 %v430, 0.0
        %v432 = vadd.f32 %v427, %v431
        %v433 = vld [vmem:[#allocation8 + $0x4] sm:$0x1]
        %v434 = vperm.slane %v433, 0
        %v435 = vadd.f32 %v410, %v434
        %v436 = vmax.f32 %v435, 0.0
        %v437 = vadd.f32 %v432, %v436
        %v438 = vld [vmem:[#allocation8 + $0x5] sm:$0x1]
        %v439 = vperm.slane %v438, 0
        %v440 = vadd.f32 %v410, %v439
        %v441 = vmax.f32 %v440, 0.0
        %v442 = vadd.f32 %v437, %v441
        %v443 = vld [vmem:[#allocation8 + $0x6] sm:$0x1]
        %v444 = vperm.slane %v443, 0
        %v445 = vadd.f32 %v410, %v444
        %v446 = vmax.f32 %v445, 0.0
        %v447 = vadd.f32 %v442, %v446
        %v448 = vld [vmem:[#allocation8 + $0x7] sm:$0x1]
        %v449 = vperm.slane %v448, 0
        %v450 = vadd.f32 %v410, %v449
        %v451 = vmax.f32 %v450, 0.0
        %v452 = vadd.f32 %v447, %v451
        %v453 = vld [vmem:[#allocation8 + $0x8] sm:$0x1]
        %v454 = vperm.slane %v453, 0
        %v455 = vadd.f32 %v410, %v454
        %v456 = vmax.f32 %v455, 0.0
        %v457 = vadd.f32 %v452, %v456
        %v458 = vld [vmem:[#allocation8 + $0x9] sm:$0x1]
        %v459 = vperm.slane %v458, 0
        %v460 = vadd.f32 %v410, %v459
        %v461 = vmax.f32 %v460, 0.0
        %v462 = vadd.f32 %v457, %v461
        %v463 = vld [vmem:[#allocation8 + $0xa] sm:$0x1]
        %v464 = vperm.slane %v463, 0
        %v465 = vadd.f32 %v410, %v464
        %v466 = vmax.f32 %v465, 0.0
        %v467 = vadd.f32 %v462, %v466
        %v468 = vld [vmem:[#allocation8 + $0xb] sm:$0x1]
        %v469 = vperm.slane %v468, 0
        %v470 = vadd.f32 %v410, %v469
        %v471 = vmax.f32 %v470, 0.0
        %v472 = vadd.f32 %v467, %v471
        %v473 = vld [vmem:[#allocation8 + $0xc] sm:$0x1]
        %v474 = vperm.slane %v473, 0
        %v475 = vadd.f32 %v410, %v474
        %v476 = vmax.f32 %v475, 0.0
        %v477 = vadd.f32 %v472, %v476
        %v478 = vld [vmem:[#allocation8 + $0xd] sm:$0x1]
        %v479 = vperm.slane %v478, 0
        %v480 = vadd.f32 %v410, %v479
        %v481 = vmax.f32 %v480, 0.0
        %v482 = vadd.f32 %v477, %v481
        %v483 = vld [vmem:[#allocation8 + $0xe] sm:$0x1]
        %v484 = vperm.slane %v483, 0
        %v485 = vadd.f32 %v410, %v484
        %v486 = vmax.f32 %v485, 0.0
        %v487 = vadd.f32 %v482, %v486
        %v488 = vld [vmem:[#allocation8 + $0xf] sm:$0x1]
        %v489 = vperm.slane %v488, 0
        %v490 = vadd.f32 %v410, %v489
        %v491 = vmax.f32 %v490, 0.0
        %v492 = vadd.f32 %v487, %v491
        %v493 = vld [vmem:[%s5] sm:$0x1]
        %v495 = vperm.slane %v493, 0
        %v497 = vmul.f32 %v492, %v495
        %v498 = vsel %vm396, %v497, 0.0
        %499 = vadd.xlane.f32.xlu0 %v498
        %v500 = vpop.xlane.xlu0 %499
        %s501 = sld [smem:[#allocation2]]
        %v502 = vstv %s501
        %v503 = vadd.f32 %v500, %v502
        %vm504 = vcmask 7168
        %505 = vst.msk [vmem:[%s346] sm:$0xff] %vm504, %v503
        %p506 = scmp.lt.s32.totalorder %s24, 1
        %s507 = scalar_select %p506, %s24, 1
        %s508 = smul.addr %s507, 8
        %s509 = scalar_lea.vmem %s7, %s508
        // Predicated region
        $region65: #{tpu_custom_call.1} parent=47 // pred_check
          %p510 = pneg %p194
        $region66: #{tpu_custom_call.1} parent=47 // pred_check_branch
          %512 = sbr.rel (%p510) target = $region68
        $region67: #{tpu_custom_call.1} parent=47 // pred_region
          _
        $region68: #{tpu_custom_call.1} parent=47 // pred_fallthru
          _
      $region48: #{tpu_custom_call.1} parent=5 // pred_fallthru
        _
      %p513 = scmp.le.s32.totalorder 2, %s19
      // Predicated region
      $region69: #{tpu_custom_call.1} parent=5 // pred_check
        %p514 = pneg %p513
      $region70: #{tpu_custom_call.1} parent=5 // pred_check_branch
        %516 = sbr.rel (%p514) target = $region72
      $region71: #{tpu_custom_call.1} parent=5 // pred_region
        %s517 = ssub.s32 %s19, 2
        // Predicated region
        $region73: #{tpu_custom_call.1} parent=71 // pred_check
          %p518 = pneg %p200
        $region74: #{tpu_custom_call.1} parent=71 // pred_check_branch
          %520 = sbr.rel (%p518) target = $region76
        $region75: #{tpu_custom_call.1} parent=71 // pred_region
          %p521 = scmp.lt.s32.totalorder %s25, 1
          %s522 = scalar_select %p521, %s25, 1
          %s523 = smul.addr %s522, 8
          %s524 = scalar_lea.vmem %s7, %s523
        $region76: #{tpu_custom_call.1} parent=71 // pred_fallthru
          _
      $region72: #{tpu_custom_call.1} parent=5 // pred_fallthru
        _
    $region6: #{tpu_custom_call.1} parent=1 // loop_footer
      %s23 = sadd.s32 1, %s19
    $region7: #{tpu_custom_call.1} parent=1 // loop_footer_branch
      %18 = sbr.rel target = $region3
    $region8: #{tpu_custom_call.1} parent=1 // loop_exit
      _
    %525 = vsyncpa [#allocation4], 1
    %s526 = scalar_lea.sflag [#allocation4], 1
    %527 = vsyncpa %s526, 1
    %528 = vsyncpa [#allocation6], 1
    %529 = vsyncpa [#allocation9], 1

</llo_original>
